<compile_context>
chip_gen: v7x
topology: tpu7x:2x2x1
jax: 0.10.0
libtpu: 0.0.40
codegen_flags: <defaults>
</compile_context>

<pallas_src>
import jax
import jax.numpy as jnp
from jax.experimental import pallas as pl
from jax.experimental.pallas import tpu as pltpu

BN_EPS = 1e-5
LEAKY_SLOPE = 0.2


# ----------------------------- kernel ---------------------------------------

def classifier_kernel(x_ref, w_ref, b_ref, w4_ref, b4_ref, out_ref):
    # x_ref : (tm, D)     bf16  activations tile
    # w_ref : (3, D, D)   bf16  BN-folded block weights (resident)
    # b_ref : (3, 1, D)   f32   BN-folded block biases  (resident)
    # w4_ref: (D, NCp)    bf16  aux weight, lane-padded to 128 for the MXU
    # b4_ref: (1, NCp)    f32   aux bias,   lane-padded
    # out_ref: (tm, NC)   f32   logits (only the real n_classes columns)
    h = x_ref[...]                                   # bf16, straight into dot #1
    for blk in range(3):                             # static unroll
        y = jnp.dot(h, w_ref[blk],
                    preferred_element_type=jnp.float32) + b_ref[blk]
        # LeakyReLU(0.2); Dropout(p=0.5) is identity at inference.
        h = jnp.maximum(y, LEAKY_SLOPE * y).astype(jnp.bfloat16)
    logits = (jnp.dot(h, w4_ref[...], preferred_element_type=jnp.float32)
              + b4_ref[...])                         # (tm, NCp) f32
    out_ref[...] = logits[:, :out_ref.shape[-1]].astype(out_ref.dtype)


# ------------------------- parameter preparation ----------------------------

def init_params(key, latent_dim, n_classes):
    """Raw (PyTorch-equivalent) params.

    Linear weights stored pre-transposed as (in, out); biases/BN params as
    (1, D). BN running stats / affine are randomized so the BN-fold path is
    actually exercised by the test.
    """
    params = []
    bound = 1.0 / jnp.sqrt(jnp.float32(latent_dim))
    keys = jax.random.split(key, 20)
    ki = 0
    for _ in range(3):
        w = jax.random.uniform(keys[ki], (latent_dim, latent_dim),
                               jnp.float32, -bound, bound); ki += 1
        b = jax.random.uniform(keys[ki], (1, latent_dim),
                               jnp.float32, -bound, bound); ki += 1
        gamma = jax.random.uniform(keys[ki], (1, latent_dim),
                                   jnp.float32, 0.5, 1.5); ki += 1
        beta = 0.2 * jax.random.normal(keys[ki], (1, latent_dim), jnp.float32); ki += 1
        rmean = 0.2 * jax.random.normal(keys[ki], (1, latent_dim), jnp.float32); ki += 1
        rvar = jax.random.uniform(keys[ki], (1, latent_dim),
                                  jnp.float32, 0.5, 1.5); ki += 1
        params += [w, b, gamma, beta, rmean, rvar]
    w4 = jax.random.uniform(keys[ki], (latent_dim, n_classes),
                            jnp.float32, -bound, bound); ki += 1
    b4 = jax.random.uniform(keys[ki], (1, n_classes),
                            jnp.float32, -bound, bound); ki += 1
    params += [w4, b4]
    return params


def fold_params(raw_params):
    """Fold BN into Linear (once, outside the kernel) and pack for the kernel.

    Returns (w_stack bf16 (3,D,D), b_stack f32 (3,1,D),
             w4 bf16 (D, NCp), b4 f32 (1, NCp)), n_classes.
    NCp = n_classes rounded up to a multiple of 128 (MXU lane minimum).
    """
    ws, bs = [], []
    for blk in range(3):
        w, b, g, be, m, v = raw_params[blk * 6: blk * 6 + 6]
        scale = g * jax.lax.rsqrt(v + BN_EPS)          # (1, D), per output feature
        ws.append(w * scale)                           # scale columns of (in, out) W
        bs.append((b - m) * scale + be)
    w_stack = jnp.stack(ws).astype(jnp.bfloat16)       # (3, D, D)
    b_stack = jnp.stack(bs).astype(jnp.float32)        # (3, 1, D)

    w4, b4 = raw_params[-2], raw_params[-1]
    d, nc = w4.shape
    ncp = ((nc + 127) // 128) * 128
    w4p = jnp.zeros((d, ncp), jnp.float32).at[:, :nc].set(w4).astype(jnp.bfloat16)
    b4p = jnp.zeros((1, ncp), jnp.float32).at[:, :nc].set(b4)
    return (w_stack, b_stack, w4p, b4p), nc


# ------------------------------ wrapper --------------------------------------

def _round_up(x, m):
    return ((x + m - 1) // m) * m


def classifier_forward(x, folded, n_classes, *, block_b=512):
    """x: (B, D) f32 (or bf16); folded: output of fold_params().
    Returns (B, n_classes) f32 logits."""
    w_stack, b_stack, w4, b4 = folded
    B, D = x.shape
    ncp = w4.shape[-1]

    # Batch tiling: big tiles amortize the ~0.35us/step overhead (kernel is
    # HBM-bound), but for mid-size batches force >= 2 grid steps so
    # dimension_semantics=("parallel",) can shard across v7x's two TCs.
    if B <= 2 * block_b:
        tm = min(_round_up(pl.cdiv(B, 2), 8), _round_up(B, 8))
    else:
        tm = block_b
    tm = max(tm, 8)
    grid = (pl.cdiv(B, tm),)

    # Activations travel HBM->VMEM as bf16 (the MXU consumes bf16 anyway).
    x_bf16 = x.astype(jnp.bfloat16)

    flops = 2 * B * D * (3 * D + ncp)
    bytes_accessed = (x_bf16.size * 2 + w_stack.size * 2 + b_stack.size * 4
                      + w4.size * 2 + b4.size * 4 + B * n_classes * 4)

    return pl.pallas_call(
        classifier_kernel,
        out_shape=jax.ShapeDtypeStruct((B, n_classes), jnp.float32),
        grid=grid,
        in_specs=[
            pl.BlockSpec((tm, D), lambda i: (i, 0)),        # x: tiled over batch
            pl.BlockSpec((3, D, D), lambda i: (0, 0, 0)),   # W_stack: resident
            pl.BlockSpec((3, 1, D), lambda i: (0, 0, 0)),   # b_stack: resident
            pl.BlockSpec((D, ncp), lambda i: (0, 0)),       # W4: resident (lane-padded)
            pl.BlockSpec((1, ncp), lambda i: (0, 0)),       # b4: resident
        ],
        # Only the real n_classes columns are written back (no padded f32 slab).
        out_specs=pl.BlockSpec((tm, n_classes), lambda i: (i, 0)),
        compiler_params=pltpu.CompilerParams(
            dimension_semantics=("parallel",)),             # megacore sharding on v7x
        cost_estimate=pl.CostEstimate(flops=flops, transcendentals=0,
                                      bytes_accessed=bytes_accessed),
    )(x_bf16, w_stack, b_stack, w4, b4)


# ------------------------------ reference ------------------------------------

def reference_forward(x, raw_params):
    """Pure-JAX f32 reference with the ORIGINAL (unfolded) PyTorch semantics."""
    h = x
    for blk in range(3):
        w, b, g, be, m, v = raw_params[blk * 6: blk * 6 + 6]
        y = h @ w + b
        y = (y - m) * (g * jax.lax.rsqrt(v + BN_EPS)) + be
        h = jnp.where(y > 0, y, LEAKY_SLOPE * y)
    w4, b4 = raw_params[-2], raw_params[-1]
    return h @ w4 + b4


# -------------------------------- main ---------------------------------------

if __name__ == "__main__":
    # Module-consistent small shapes: opt.latent_dim=128, opt.n_classes=16.
    LATENT_DIM, N_CLASSES = 128, 16

    key = jax.random.PRNGKey(0)
    kx, kp = jax.random.split(key)
    raw_params = init_params(kp, LATENT_DIM, N_CLASSES)

    folded, nc = fold_params(raw_params)   # BN fold + packing done ONCE, outside the kernel
    assert nc == N_CLASSES

    # B=8: single grid step. B=24: two grid steps with a partial last tile,
    # exercising the batch pipeline + output masking path.
    for B in (8, 24):
        x = jax.random.normal(jax.random.fold_in(kx, B), (B, LATENT_DIM), jnp.float32)
        scores = jax.block_until_ready(classifier_forward(x, folded, N_CLASSES))
        ref = reference_forward(x, raw_params)
        assert scores.shape == (B, N_CLASSES)
        # bf16 activations/weights + BN folding -> relaxed tolerance vs f32 reference.
        assert jnp.allclose(scores, ref, atol=5e-2, rtol=5e-2), f"mismatch vs reference (B={B})"

    print("KERNEL_OK")
</pallas_src>

<mosaic_0001>
module attributes {stable_mosaic.version = 11 : i64} {
  func.func @classifier_kernel(%arg0: i32, %arg1: memref<8x128xbf16, #tpu.memory_space<vmem>>, %arg2: memref<3x128x128xbf16, #tpu.memory_space<vmem>>, %arg3: memref<3x1x128xf32, #tpu.memory_space<vmem>>, %arg4: memref<128x128xbf16, #tpu.memory_space<vmem>>, %arg5: memref<1x128xf32, #tpu.memory_space<vmem>>, %arg6: memref<8x16xf32, #tpu.memory_space<vmem>>) attributes {dimension_semantics = [#tpu.dimension_semantics<parallel>], iteration_bounds = array<i64: 1>, scalar_prefetch = 0 : i64, scratch_operands = 0 : i64, tpu.core_type = #tpu.core_type<tc>, window_params = [{transform_indices = @transform_0, window_bounds = array<i64: 8, 128>}, {pipeline_mode = #tpu.pipeline_mode<synchronous>, transform_indices = @transform_1, window_bounds = array<i64: 3, 128, 128>}, {pipeline_mode = #tpu.pipeline_mode<synchronous>, transform_indices = @transform_2, window_bounds = array<i64: 3, 1, 128>}, {pipeline_mode = #tpu.pipeline_mode<synchronous>, transform_indices = @transform_3, window_bounds = array<i64: 128, 128>}, {pipeline_mode = #tpu.pipeline_mode<synchronous>, transform_indices = @transform_4, window_bounds = array<i64: 1, 128>}, {transform_indices = @transform_5, window_bounds = array<i64: 8, 16>}]} {
    %c0 = arith.constant 0 : index
    %c0_0 = arith.constant 0 : index
    %0 = vector.load %arg1[%c0, %c0_0] : memref<8x128xbf16, #tpu.memory_space<vmem>>, vector<8x128xbf16>
    %c0_1 = arith.constant 0 : index
    %c0_2 = arith.constant 0 : index
    %c0_3 = arith.constant 0 : index
    %1 = vector.load %arg2[%c0_1, %c0_2, %c0_3] : memref<3x128x128xbf16, #tpu.memory_space<vmem>>, vector<1x128x128xbf16>
    %2 = vector.shape_cast %1 : vector<1x128x128xbf16> to vector<128x128xbf16>
    %cst = arith.constant dense<0.000000e+00> : vector<8x128xf32>
    %3 = tpu.matmul %0, %2, %cst {dimension_numbers = #tpu.dot_dimension_numbers<[1], [0], [0], [1], [0, 0, 1, 1], [], []>} : vector<8x128xbf16>, vector<128x128xbf16>, vector<8x128xf32> -> vector<8x128xf32>
    %c0_4 = arith.constant 0 : index
    %c0_5 = arith.constant 0 : index
    %c0_6 = arith.constant 0 : index
    %4 = vector.load %arg3[%c0_4, %c0_5, %c0_6] : memref<3x1x128xf32, #tpu.memory_space<vmem>>, vector<1x1x128xf32>
    %5 = vector.shape_cast %4 : vector<1x1x128xf32> to vector<1x128xf32>
    %6 = vector.broadcast %5 : vector<1x128xf32> to vector<8x128xf32>
    %7 = arith.addf %3, %6 : vector<8x128xf32>
    %cst_7 = arith.constant 2.000000e-01 : f32
    %8 = vector.broadcast %cst_7 : f32 to vector<8x128xf32>
    %9 = arith.mulf %8, %7 : vector<8x128xf32>
    %10 = arith.maximumf %7, %9 : vector<8x128xf32>
    %11 = arith.truncf %10 : vector<8x128xf32> to vector<8x128xbf16>
    %c1 = arith.constant 1 : index
    %c0_8 = arith.constant 0 : index
    %c0_9 = arith.constant 0 : index
    %12 = vector.load %arg2[%c1, %c0_8, %c0_9] : memref<3x128x128xbf16, #tpu.memory_space<vmem>>, vector<1x128x128xbf16>
    %13 = vector.shape_cast %12 : vector<1x128x128xbf16> to vector<128x128xbf16>
    %cst_10 = arith.constant dense<0.000000e+00> : vector<8x128xf32>
    %14 = tpu.matmul %11, %13, %cst_10 {dimension_numbers = #tpu.dot_dimension_numbers<[1], [0], [0], [1], [0, 0, 1, 1], [], []>} : vector<8x128xbf16>, vector<128x128xbf16>, vector<8x128xf32> -> vector<8x128xf32>
    %c1_11 = arith.constant 1 : index
    %c0_12 = arith.constant 0 : index
    %c0_13 = arith.constant 0 : index
    %15 = vector.load %arg3[%c1_11, %c0_12, %c0_13] : memref<3x1x128xf32, #tpu.memory_space<vmem>>, vector<1x1x128xf32>
    %16 = vector.shape_cast %15 : vector<1x1x128xf32> to vector<1x128xf32>
    %17 = vector.broadcast %16 : vector<1x128xf32> to vector<8x128xf32>
    %18 = arith.addf %14, %17 : vector<8x128xf32>
    %cst_14 = arith.constant 2.000000e-01 : f32
    %19 = vector.broadcast %cst_14 : f32 to vector<8x128xf32>
    %20 = arith.mulf %19, %18 : vector<8x128xf32>
    %21 = arith.maximumf %18, %20 : vector<8x128xf32>
    %22 = arith.truncf %21 : vector<8x128xf32> to vector<8x128xbf16>
    %c2 = arith.constant 2 : index
    %c0_15 = arith.constant 0 : index
    %c0_16 = arith.constant 0 : index
    %23 = vector.load %arg2[%c2, %c0_15, %c0_16] : memref<3x128x128xbf16, #tpu.memory_space<vmem>>, vector<1x128x128xbf16>
    %24 = vector.shape_cast %23 : vector<1x128x128xbf16> to vector<128x128xbf16>
    %cst_17 = arith.constant dense<0.000000e+00> : vector<8x128xf32>
    %25 = tpu.matmul %22, %24, %cst_17 {dimension_numbers = #tpu.dot_dimension_numbers<[1], [0], [0], [1], [0, 0, 1, 1], [], []>} : vector<8x128xbf16>, vector<128x128xbf16>, vector<8x128xf32> -> vector<8x128xf32>
    %c2_18 = arith.constant 2 : index
    %c0_19 = arith.constant 0 : index
    %c0_20 = arith.constant 0 : index
    %26 = vector.load %arg3[%c2_18, %c0_19, %c0_20] : memref<3x1x128xf32, #tpu.memory_space<vmem>>, vector<1x1x128xf32>
    %27 = vector.shape_cast %26 : vector<1x1x128xf32> to vector<1x128xf32>
    %28 = vector.broadcast %27 : vector<1x128xf32> to vector<8x128xf32>
    %29 = arith.addf %25, %28 : vector<8x128xf32>
    %cst_21 = arith.constant 2.000000e-01 : f32
    %30 = vector.broadcast %cst_21 : f32 to vector<8x128xf32>
    %31 = arith.mulf %30, %29 : vector<8x128xf32>
    %32 = arith.maximumf %29, %31 : vector<8x128xf32>
    %33 = arith.truncf %32 : vector<8x128xf32> to vector<8x128xbf16>
    %c0_22 = arith.constant 0 : index
    %c0_23 = arith.constant 0 : index
    %34 = vector.load %arg4[%c0_22, %c0_23] : memref<128x128xbf16, #tpu.memory_space<vmem>>, vector<128x128xbf16>
    %cst_24 = arith.constant dense<0.000000e+00> : vector<8x128xf32>
    %35 = tpu.matmul %33, %34, %cst_24 {dimension_numbers = #tpu.dot_dimension_numbers<[1], [0], [0], [1], [0, 0, 1, 1], [], []>} : vector<8x128xbf16>, vector<128x128xbf16>, vector<8x128xf32> -> vector<8x128xf32>
    %c0_25 = arith.constant 0 : index
    %c0_26 = arith.constant 0 : index
    %36 = vector.load %arg5[%c0_25, %c0_26] : memref<1x128xf32, #tpu.memory_space<vmem>>, vector<1x128xf32>
    %37 = vector.broadcast %36 : vector<1x128xf32> to vector<8x128xf32>
    %38 = arith.addf %35, %37 : vector<8x128xf32>
    %39 = vector.extract_strided_slice %38 {offsets = [0, 0], sizes = [8, 16], strides = [1, 1]} : vector<8x128xf32> to vector<8x16xf32>
    %c0_27 = arith.constant 0 : index
    %c0_28 = arith.constant 0 : index
    %40 = vector.load %arg6[%c0_27, %c0_28] : memref<8x16xf32, #tpu.memory_space<vmem>>, vector<8x16xf32>
    tpu.vector_store %arg6[%c0_27, %c0_28], %39 {strides = array<i32>} : memref<8x16xf32, #tpu.memory_space<vmem>>, vector<8x16xf32>,
    return
  }
  func.func @transform_0(%arg0: i32) -> (i32, i32) {
    %c0_i32 = arith.constant 0 : i32
    %c0_i32_0 = arith.constant 0 : i32
    return %arg0, %c0_i32 : i32, i32
  }
  func.func @transform_1(%arg0: i32) -> (i32, i32, i32) {
    %c0_i32 = arith.constant 0 : i32
    %c0_i32_0 = arith.constant 0 : i32
    %c0_i32_1 = arith.constant 0 : i32
    %c0_i32_2 = arith.constant 0 : i32
    return %c0_i32, %c0_i32_0, %c0_i32_1 : i32, i32, i32
  }
  func.func @transform_2(%arg0: i32) -> (i32, i32, i32) {
    %c0_i32 = arith.constant 0 : i32
    %c0_i32_0 = arith.constant 0 : i32
    %c0_i32_1 = arith.constant 0 : i32
    %c0_i32_2 = arith.constant 0 : i32
    return %c0_i32, %c0_i32_0, %c0_i32_1 : i32, i32, i32
  }
  func.func @transform_3(%arg0: i32) -> (i32, i32) {
    %c0_i32 = arith.constant 0 : i32
    %c0_i32_0 = arith.constant 0 : i32
    %c0_i32_1 = arith.constant 0 : i32
    return %c0_i32, %c0_i32_0 : i32, i32
  }
  func.func @transform_4(%arg0: i32) -> (i32, i32) {
    %c0_i32 = arith.constant 0 : i32
    %c0_i32_0 = arith.constant 0 : i32
    %c0_i32_1 = arith.constant 0 : i32
    return %c0_i32, %c0_i32_0 : i32, i32
  }
  func.func @transform_5(%arg0: i32) -> (i32, i32) {
    %c0_i32 = arith.constant 0 : i32
    %c0_i32_0 = arith.constant 0 : i32
    return %arg0, %c0_i32 : i32, i32
  }
}

</mosaic_0001>

<llo_original>
// kernel: tpu_custom_call.1
$region0: #{tpu_custom_call.1}
  #allocation0 [shape = 'u32[]', space=smem, size = 0x4, offset = 0x4, fixed_abs, tag = 'smem constant byte address 0x4 - core index']
  #allocation1 [shape = 'u32[144,128]{1,0:T(1,128)}', space=vmem, size = 0x12000, scoped, tag = 'internal scratch']
  %s0 = inlined_call_operand.hbm [shape: bf16[8,128], index: 0, kind: input, shape index: {}]
  %s1 = inlined_call_operand.hbm [shape: bf16[3,128,128], index: 1, kind: input, shape index: {}]
  %s2 = inlined_call_operand.vmem [shape: f32[3,1,128], index: 2, kind: input, shape index: {}]
  %s3 = inlined_call_operand.hbm [shape: bf16[128,128], index: 3, kind: input, shape index: {}]
  %s4 = inlined_call_operand.vmem [shape: f32[1,128], index: 4, kind: input, shape index: {}]
  %s5 = inlined_call_operand.hbm [shape: f32[8,16], index: 5, kind: output, shape index: {}]
  %s6 = sld [smem:[#allocation0]]
  $region42: #{tpu_custom_call.1} parent=0
    _
  %s8 = ssub.s32 1, %s6
  %s9 = scalar_select 0, %s8, %s6
  $region1: #{tpu_custom_call.1} parent=0
    #allocation2 [shape = 'u8[2048]{0}', space=vmem, size = 0x800, scoped, tag = 'input window, operand 0, single buffered']
    #allocation3 [shape = 's32[1]{0}', space=sflag, size = 0x4, scoped, tag = 'scoped memory for tpu_custom_call.1']
    #allocation4 [shape = 's32[1]{0}', space=sflag, size = 0x4, scoped, tag = 'scoped memory for tpu_custom_call.1']
    #allocation5 [shape = 'u8[98304]{0}', space=vmem, size = 0x18000, scoped, tag = 'input window, operand 1, single buffered']
    #allocation6 [shape = 's32[1]{0}', space=sflag, size = 0x4, scoped, tag = 'scoped memory for tpu_custom_call.1']
    #allocation7 [shape = 'u8[32768]{0}', space=vmem, size = 0x8000, scoped, tag = 'input window, operand 3, single buffered']
    #allocation8 [shape = 'u8[4096]{0}', space=vmem, size = 0x1000, scoped, tag = 'output window, operand 0, single buffered']
    %10 = vsyncpa [#allocation3], 0
    %11 = vsyncpa [#allocation6], 0
    %12 = vsyncpa [#allocation4], 0
    // Predicated region
    $region2: #{tpu_custom_call.1} parent=1 // pred_check
      _
    $region3: #{tpu_custom_call.1} parent=1 // pred_check_branch
      %14 = sbr.rel (0) target = $region5
    $region4: #{tpu_custom_call.1} parent=1 // pred_region
      %s16 = ssub.s32 64, 64
      %17 = vsyncadd [#allocation3], %s16
      %s19 = sshll.u32 [#allocation2], 4
      %s20 = int_to_ptr.vmem [resolvable:$true] %s19
      %22 = dma.hbm_to_vmem [thread:$0]  %s0, 64, %s20, [#allocation3]
    $region5: #{tpu_custom_call.1} parent=1 // pred_fallthru
      _
    // Predicated region
    $region6: #{tpu_custom_call.1} parent=1 // pred_check
      _
    $region7: #{tpu_custom_call.1} parent=1 // pred_check_branch
      %24 = sbr.rel (0) target = $region9
    $region8: #{tpu_custom_call.1} parent=1 // pred_region
      %s26 = ssub.s32 3072, 3072
      %27 = vsyncadd [#allocation6], %s26
      %s28 = sshll.u32 [#allocation5], 4
      %s29 = int_to_ptr.vmem [resolvable:$true] %s28
      %34 = dma.hbm_to_vmem [thread:$0]  %s1, 3072, %s29, [#allocation6], 64, 64, 4
    $region9: #{tpu_custom_call.1} parent=1 // pred_fallthru
      _
    // Predicated region
    $region10: #{tpu_custom_call.1} parent=1 // pred_check
      _
    $region11: #{tpu_custom_call.1} parent=1 // pred_check_branch
      %36 = sbr.rel (0) target = $region13
    $region12: #{tpu_custom_call.1} parent=1 // pred_region
      _
    $region13: #{tpu_custom_call.1} parent=1 // pred_fallthru
      _
    // Predicated region
    $region14: #{tpu_custom_call.1} parent=1 // pred_check
      _
    $region15: #{tpu_custom_call.1} parent=1 // pred_check_branch
      %38 = sbr.rel (0) target = $region17
    $region16: #{tpu_custom_call.1} parent=1 // pred_region
      %s40 = ssub.s32 1024, 1024
      %41 = vsyncadd [#allocation6], %s40
      %s42 = sshll.u32 [#allocation7], 4
      %s43 = int_to_ptr.vmem [resolvable:$true] %s42
      %48 = dma.hbm_to_vmem [thread:$0]  %s3, 1024, %s43, [#allocation6], 64, 64, 4
    $region17: #{tpu_custom_call.1} parent=1 // pred_fallthru
      _
    // Predicated region
    $region18: #{tpu_custom_call.1} parent=1 // pred_check
      _
    $region19: #{tpu_custom_call.1} parent=1 // pred_check_branch
      %50 = sbr.rel (0) target = $region21
    $region20: #{tpu_custom_call.1} parent=1 // pred_region
      _
    $region21: #{tpu_custom_call.1} parent=1 // pred_fallthru
      _
    // Predicated region
    $region22: #{tpu_custom_call.1} parent=1 // pred_check
      _
    $region23: #{tpu_custom_call.1} parent=1 // pred_check_branch
      %52 = sbr.rel (0) target = $region25
    $region24: #{tpu_custom_call.1} parent=1 // pred_region
      %53 = dma.done [#allocation3], 64
    $region25: #{tpu_custom_call.1} parent=1 // pred_fallthru
      _
    // Predicated region
    $region26: #{tpu_custom_call.1} parent=1 // pred_check
      _
    $region27: #{tpu_custom_call.1} parent=1 // pred_check_branch
      %55 = sbr.rel (0) target = $region29
    $region28: #{tpu_custom_call.1} parent=1 // pred_region
      %56 = dma.done [#allocation6], 3072
    $region29: #{tpu_custom_call.1} parent=1 // pred_fallthru
      _
    // Predicated region
    $region30: #{tpu_custom_call.1} parent=1 // pred_check
      _
    $region31: #{tpu_custom_call.1} parent=1 // pred_check_branch
      %58 = sbr.rel (0) target = $region33
    $region32: #{tpu_custom_call.1} parent=1 // pred_region
      %59 = dma.done [#allocation6], 1024
    $region33: #{tpu_custom_call.1} parent=1 // pred_fallthru
      _
    %v61 = vld [vmem:[#allocation2] sm:$0xf]
    %v62 = vld [vmem:[#allocation5] sm:$0xf]
    %v63 = vld [vmem:[#allocation5 + $0x4] sm:$0xf]
    %v64 = vld [vmem:[#allocation5 + $0x8] sm:$0xf]
    %v65 = vld [vmem:[#allocation5 + $0xc] sm:$0xf]
    %v66 = vld [vmem:[#allocation5 + $0x10] sm:$0xf]
    %v67 = vld [vmem:[#allocation5 + $0x14] sm:$0xf]
    %v68 = vld [vmem:[#allocation5 + $0x18] sm:$0xf]
    %v69 = vld [vmem:[#allocation5 + $0x1c] sm:$0xf]
    %v70 = vld [vmem:[#allocation5 + $0x20] sm:$0xf]
    %v71 = vld [vmem:[#allocation5 + $0x24] sm:$0xf]
    %v72 = vld [vmem:[#allocation5 + $0x28] sm:$0xf]
    %v73 = vld [vmem:[#allocation5 + $0x2c] sm:$0xf]
    %v74 = vld [vmem:[#allocation5 + $0x30] sm:$0xf]
    %v75 = vld [vmem:[#allocation5 + $0x34] sm:$0xf]
    %v76 = vld [vmem:[#allocation5 + $0x38] sm:$0xf]
    %v77 = vld [vmem:[#allocation5 + $0x3c] sm:$0xf]
    %v78 = vld [vmem:[%s2] sm:$0x1]
    %v80 = vlaneseq
    %v81 = vshrl.u32 %v80, 7
    %v82 = vsub.s32 0, %v81
    %v83 = vrot.slane %v78, %v82
    %v101 = vunpack.c.l.b16 %v62
    %v102 = vunpack.c.l.b16 %v63
    %v103 = vunpack.c.l.b16 %v64
    %v104 = vunpack.c.l.b16 %v65
    %v105 = vunpack.c.l.b16 %v66
    %v106 = vunpack.c.l.b16 %v67
    %v107 = vunpack.c.l.b16 %v68
    %v108 = vunpack.c.l.b16 %v69
    %v109 = vunpack.c.l.b16 %v70
    %v110 = vunpack.c.l.b16 %v71
    %v111 = vunpack.c.l.b16 %v72
    %v112 = vunpack.c.l.b16 %v73
    %v113 = vunpack.c.l.b16 %v74
    %v114 = vunpack.c.l.b16 %v75
    %v115 = vunpack.c.l.b16 %v76
    %v116 = vunpack.c.l.b16 %v77
    %v117 = vpack.c.b16 %v102, %v101
    %v118 = vpack.c.b16 %v104, %v103
    %v119 = vpack.c.b16 %v106, %v105
    %v120 = vpack.c.b16 %v108, %v107
    %v121 = vpack.c.b16 %v110, %v109
    %v122 = vpack.c.b16 %v112, %v111
    %v123 = vpack.c.b16 %v114, %v113
    %v124 = vpack.c.b16 %v116, %v115
    %133 = vmatprep.subr.bf16.mxu0 0
    %134 = vmatpush1.bf16.msra.mxu0 %v117
    %135 = vmatprep.subr.bf16.mxu0 0
    %136 = vmatpush1.bf16.msra.mxu0 %v118
    %137 = vmatprep.subr.bf16.mxu0 0
    %138 = vmatpush1.bf16.msra.mxu0 %v119
    %139 = vmatprep.subr.bf16.mxu0 0
    %140 = vmatpush1.bf16.msra.mxu0 %v120
    %141 = vmatprep.subr.bf16.mxu0 0
    %142 = vmatpush1.bf16.msra.mxu0 %v121
    %143 = vmatprep.subr.bf16.mxu0 0
    %144 = vmatpush1.bf16.msra.mxu0 %v122
    %145 = vmatprep.subr.bf16.mxu0 0
    %146 = vmatpush1.bf16.msra.mxu0 %v123
    %147 = vmatprep.subr.bf16.mxu0 0
    %148 = vmatpush1.bf16.msra.mxu0 %v124
    %149 = vmatprep.subr.bf16.mxu0 0
    %150 = vmatpush1.bf16.msra.mxu0 0
    %151 = vmatprep.subr.bf16.mxu0 0
    %152 = vmatpush1.bf16.msra.mxu0 0
    %153 = vmatprep.subr.bf16.mxu0 0
    %154 = vmatpush1.bf16.msra.mxu0 0
    %155 = vmatprep.subr.bf16.mxu0 0
    %156 = vmatpush1.bf16.msra.mxu0 0
    %157 = vmatprep.subr.bf16.mxu0 0
    %158 = vmatpush1.bf16.msra.mxu0 0
    %159 = vmatprep.subr.bf16.mxu0 0
    %160 = vmatpush1.bf16.msra.mxu0 0
    %161 = vmatprep.subr.bf16.mxu0 0
    %162 = vmatpush1.bf16.msra.mxu0 0
    %163 = vmatprep.subr.bf16.mxu0 0
    %164 = vmatpush1.bf16.msra.mxu0 0
    %165 = vmatprep.mubr.bf16.mxu0 0
    %166 = vmatmul.mubr.bf16.gmra.mrb[0].mxu0 %v61
    %v167 = vpop.f32.mrb[0].mxu0
    %v168 = vadd.f32 %v83, %v167
    %v169 = vpop.f32.mrb[0].mxu0
    %v170 = vpop.f32.mrb[0].mxu0
    %v171 = vpop.f32.mrb[0].mxu0
    %172 = vdwg.mxu0
    %v173 = vmul.f32 %v168, 0.2
    %v174 = vmax.f32 %v168, %v173
    %v175 = vpack.c.bf16 %v174, %v174
    %s176 = scalar_lea.vmem [#allocation5], 64
    %v177 = vld [vmem:[%s176] sm:$0xf]
    %v178 = vld [vmem:[%s176 + $0x4] sm:$0xf]
    %v179 = vld [vmem:[%s176 + $0x8] sm:$0xf]
    %v180 = vld [vmem:[%s176 + $0xc] sm:$0xf]
    %v181 = vld [vmem:[%s176 + $0x10] sm:$0xf]
    %v182 = vld [vmem:[%s176 + $0x14] sm:$0xf]
    %v183 = vld [vmem:[%s176 + $0x18] sm:$0xf]
    %v184 = vld [vmem:[%s176 + $0x1c] sm:$0xf]
    %v185 = vld [vmem:[%s176 + $0x20] sm:$0xf]
    %v186 = vld [vmem:[%s176 + $0x24] sm:$0xf]
    %v187 = vld [vmem:[%s176 + $0x28] sm:$0xf]
    %v188 = vld [vmem:[%s176 + $0x2c] sm:$0xf]
    %v189 = vld [vmem:[%s176 + $0x30] sm:$0xf]
    %v190 = vld [vmem:[%s176 + $0x34] sm:$0xf]
    %v191 = vld [vmem:[%s176 + $0x38] sm:$0xf]
    %v192 = vld [vmem:[%s176 + $0x3c] sm:$0xf]
    %s193 = scalar_lea.vmem %s2, 1
    %v194 = vld [vmem:[%s193] sm:$0x1]
    %v196 = vlaneseq
    %v197 = vshrl.u32 %v196, 7
    %v198 = vsub.s32 0, %v197
    %v199 = vrot.slane %v194, %v198
    %v217 = vunpack.c.l.b16 %v177
    %v218 = vunpack.c.l.b16 %v178
    %v219 = vunpack.c.l.b16 %v179
    %v220 = vunpack.c.l.b16 %v180
    %v221 = vunpack.c.l.b16 %v181
    %v222 = vunpack.c.l.b16 %v182
    %v223 = vunpack.c.l.b16 %v183
    %v224 = vunpack.c.l.b16 %v184
    %v225 = vunpack.c.l.b16 %v185
    %v226 = vunpack.c.l.b16 %v186
    %v227 = vunpack.c.l.b16 %v187
    %v228 = vunpack.c.l.b16 %v188
    %v229 = vunpack.c.l.b16 %v189
    %v230 = vunpack.c.l.b16 %v190
    %v231 = vunpack.c.l.b16 %v191
    %v232 = vunpack.c.l.b16 %v192
    %v233 = vpack.c.b16 %v218, %v217
    %v234 = vpack.c.b16 %v220, %v219
    %v235 = vpack.c.b16 %v222, %v221
    %v236 = vpack.c.b16 %v224, %v223
    %v237 = vpack.c.b16 %v226, %v225
    %v238 = vpack.c.b16 %v228, %v227
    %v239 = vpack.c.b16 %v230, %v229
    %v240 = vpack.c.b16 %v232, %v231
    %249 = vmatprep.subr.bf16.mxu0 0
    %250 = vmatpush1.bf16.msra.mxu0 %v233
    %251 = vmatprep.subr.bf16.mxu0 0
    %252 = vmatpush1.bf16.msra.mxu0 %v234
    %253 = vmatprep.subr.bf16.mxu0 0
    %254 = vmatpush1.bf16.msra.mxu0 %v235
    %255 = vmatprep.subr.bf16.mxu0 0
    %256 = vmatpush1.bf16.msra.mxu0 %v236
    %257 = vmatprep.subr.bf16.mxu0 0
    %258 = vmatpush1.bf16.msra.mxu0 %v237
    %259 = vmatprep.subr.bf16.mxu0 0
    %260 = vmatpush1.bf16.msra.mxu0 %v238
    %261 = vmatprep.subr.bf16.mxu0 0
    %262 = vmatpush1.bf16.msra.mxu0 %v239
    %263 = vmatprep.subr.bf16.mxu0 0
    %264 = vmatpush1.bf16.msra.mxu0 %v240
    %265 = vmatprep.subr.bf16.mxu0 0
    %266 = vmatpush1.bf16.msra.mxu0 0
    %267 = vmatprep.subr.bf16.mxu0 0
    %268 = vmatpush1.bf16.msra.mxu0 0
    %269 = vmatprep.subr.bf16.mxu0 0
    %270 = vmatpush1.bf16.msra.mxu0 0
    %271 = vmatprep.subr.bf16.mxu0 0
    %272 = vmatpush1.bf16.msra.mxu0 0
    %273 = vmatprep.subr.bf16.mxu0 0
    %274 = vmatpush1.bf16.msra.mxu0 0
    %275 = vmatprep.subr.bf16.mxu0 0
    %276 = vmatpush1.bf16.msra.mxu0 0
    %277 = vmatprep.subr.bf16.mxu0 0
    %278 = vmatpush1.bf16.msra.mxu0 0
    %279 = vmatprep.subr.bf16.mxu0 0
    %280 = vmatpush1.bf16.msra.mxu0 0
    %281 = vmatprep.mubr.bf16.mxu0 0
    %282 = vmatmul.mubr.bf16.gmra.mrb[0].mxu0 %v175
    %v283 = vpop.f32.mrb[0].mxu0
    %v284 = vadd.f32 %v199, %v283
    %v285 = vpop.f32.mrb[0].mxu0
    %v286 = vpop.f32.mrb[0].mxu0
    %v287 = vpop.f32.mrb[0].mxu0
    %288 = vdwg.mxu0
    %v289 = vmul.f32 %v284, 0.2
    %v290 = vmax.f32 %v284, %v289
    %v291 = vpack.c.bf16 %v290, %v290
    %s292 = scalar_lea.vmem [#allocation5], 128
    %v293 = vld [vmem:[%s292] sm:$0xf]
    %v294 = vld [vmem:[%s292 + $0x4] sm:$0xf]
    %v295 = vld [vmem:[%s292 + $0x8] sm:$0xf]
    %v296 = vld [vmem:[%s292 + $0xc] sm:$0xf]
    %v297 = vld [vmem:[%s292 + $0x10] sm:$0xf]
    %v298 = vld [vmem:[%s292 + $0x14] sm:$0xf]
    %v299 = vld [vmem:[%s292 + $0x18] sm:$0xf]
    %v300 = vld [vmem:[%s292 + $0x1c] sm:$0xf]
    %v301 = vld [vmem:[%s292 + $0x20] sm:$0xf]
    %v302 = vld [vmem:[%s292 + $0x24] sm:$0xf]
    %v303 = vld [vmem:[%s292 + $0x28] sm:$0xf]
    %v304 = vld [vmem:[%s292 + $0x2c] sm:$0xf]
    %v305 = vld [vmem:[%s292 + $0x30] sm:$0xf]
    %v306 = vld [vmem:[%s292 + $0x34] sm:$0xf]
    %v307 = vld [vmem:[%s292 + $0x38] sm:$0xf]
    %v308 = vld [vmem:[%s292 + $0x3c] sm:$0xf]
    %s309 = scalar_lea.vmem %s2, 2
    %v310 = vld [vmem:[%s309] sm:$0x1]
    %v312 = vlaneseq
    %v313 = vshrl.u32 %v312, 7
    %v314 = vsub.s32 0, %v313
    %v315 = vrot.slane %v310, %v314
    %v333 = vunpack.c.l.b16 %v293
    %v334 = vunpack.c.l.b16 %v294
    %v335 = vunpack.c.l.b16 %v295
    %v336 = vunpack.c.l.b16 %v296
    %v337 = vunpack.c.l.b16 %v297
    %v338 = vunpack.c.l.b16 %v298
    %v339 = vunpack.c.l.b16 %v299
    %v340 = vunpack.c.l.b16 %v300
    %v341 = vunpack.c.l.b16 %v301
    %v342 = vunpack.c.l.b16 %v302
    %v343 = vunpack.c.l.b16 %v303
    %v344 = vunpack.c.l.b16 %v304
    %v345 = vunpack.c.l.b16 %v305
    %v346 = vunpack.c.l.b16 %v306
    %v347 = vunpack.c.l.b16 %v307
    %v348 = vunpack.c.l.b16 %v308
    %v349 = vpack.c.b16 %v334, %v333
    %v350 = vpack.c.b16 %v336, %v335
    %v351 = vpack.c.b16 %v338, %v337
    %v352 = vpack.c.b16 %v340, %v339
    %v353 = vpack.c.b16 %v342, %v341
    %v354 = vpack.c.b16 %v344, %v343
    %v355 = vpack.c.b16 %v346, %v345
    %v356 = vpack.c.b16 %v348, %v347
    %365 = vmatprep.subr.bf16.mxu0 0
    %366 = vmatpush1.bf16.msra.mxu0 %v349
    %367 = vmatprep.subr.bf16.mxu0 0
    %368 = vmatpush1.bf16.msra.mxu0 %v350
    %369 = vmatprep.subr.bf16.mxu0 0
    %370 = vmatpush1.bf16.msra.mxu0 %v351
    %371 = vmatprep.subr.bf16.mxu0 0
    %372 = vmatpush1.bf16.msra.mxu0 %v352
    %373 = vmatprep.subr.bf16.mxu0 0
    %374 = vmatpush1.bf16.msra.mxu0 %v353
    %375 = vmatprep.subr.bf16.mxu0 0
    %376 = vmatpush1.bf16.msra.mxu0 %v354
    %377 = vmatprep.subr.bf16.mxu0 0
    %378 = vmatpush1.bf16.msra.mxu0 %v355
    %379 = vmatprep.subr.bf16.mxu0 0
    %380 = vmatpush1.bf16.msra.mxu0 %v356
    %381 = vmatprep.subr.bf16.mxu0 0
    %382 = vmatpush1.bf16.msra.mxu0 0
    %383 = vmatprep.subr.bf16.mxu0 0
    %384 = vmatpush1.bf16.msra.mxu0 0
    %385 = vmatprep.subr.bf16.mxu0 0
    %386 = vmatpush1.bf16.msra.mxu0 0
    %387 = vmatprep.subr.bf16.mxu0 0
    %388 = vmatpush1.bf16.msra.mxu0 0
    %389 = vmatprep.subr.bf16.mxu0 0
    %390 = vmatpush1.bf16.msra.mxu0 0
    %391 = vmatprep.subr.bf16.mxu0 0
    %392 = vmatpush1.bf16.msra.mxu0 0
    %393 = vmatprep.subr.bf16.mxu0 0
    %394 = vmatpush1.bf16.msra.mxu0 0
    %395 = vmatprep.subr.bf16.mxu0 0
    %396 = vmatpush1.bf16.msra.mxu0 0
    %397 = vmatprep.mubr.bf16.mxu0 0
    %398 = vmatmul.mubr.bf16.gmra.mrb[0].mxu0 %v291
    %v399 = vpop.f32.mrb[0].mxu0
    %v400 = vadd.f32 %v315, %v399
    %v401 = vpop.f32.mrb[0].mxu0
    %v402 = vpop.f32.mrb[0].mxu0
    %v403 = vpop.f32.mrb[0].mxu0
    %404 = vdwg.mxu0
    %v405 = vmul.f32 %v400, 0.2
    %v406 = vmax.f32 %v400, %v405
    %v407 = vpack.c.bf16 %v406, %v406
    %v408 = vld [vmem:[#allocation7] sm:$0xf]
    %v409 = vld [vmem:[#allocation7 + $0x4] sm:$0xf]
    %v410 = vld [vmem:[#allocation7 + $0x8] sm:$0xf]
    %v411 = vld [vmem:[#allocation7 + $0xc] sm:$0xf]
    %v412 = vld [vmem:[#allocation7 + $0x10] sm:$0xf]
    %v413 = vld [vmem:[#allocation7 + $0x14] sm:$0xf]
    %v414 = vld [vmem:[#allocation7 + $0x18] sm:$0xf]
    %v415 = vld [vmem:[#allocation7 + $0x1c] sm:$0xf]
    %v416 = vld [vmem:[#allocation7 + $0x20] sm:$0xf]
    %v417 = vld [vmem:[#allocation7 + $0x24] sm:$0xf]
    %v418 = vld [vmem:[#allocation7 + $0x28] sm:$0xf]
    %v419 = vld [vmem:[#allocation7 + $0x2c] sm:$0xf]
    %v420 = vld [vmem:[#allocation7 + $0x30] sm:$0xf]
    %v421 = vld [vmem:[#allocation7 + $0x34] sm:$0xf]
    %v422 = vld [vmem:[#allocation7 + $0x38] sm:$0xf]
    %v423 = vld [vmem:[#allocation7 + $0x3c] sm:$0xf]
    %v424 = vld [vmem:[%s4] sm:$0x1]
    %v426 = vlaneseq
    %v427 = vshrl.u32 %v426, 7
    %v428 = vsub.s32 0, %v427
    %v429 = vrot.slane %v424, %v428
    %v447 = vunpack.c.l.b16 %v408
    %v448 = vunpack.c.l.b16 %v409
    %v449 = vunpack.c.l.b16 %v410
    %v450 = vunpack.c.l.b16 %v411
    %v451 = vunpack.c.l.b16 %v412
    %v452 = vunpack.c.l.b16 %v413
    %v453 = vunpack.c.l.b16 %v414
    %v454 = vunpack.c.l.b16 %v415
    %v455 = vunpack.c.l.b16 %v416
    %v456 = vunpack.c.l.b16 %v417
    %v457 = vunpack.c.l.b16 %v418
    %v458 = vunpack.c.l.b16 %v419
    %v459 = vunpack.c.l.b16 %v420
    %v460 = vunpack.c.l.b16 %v421
    %v461 = vunpack.c.l.b16 %v422
    %v462 = vunpack.c.l.b16 %v423
    %v463 = vpack.c.b16 %v448, %v447
    %v464 = vpack.c.b16 %v450, %v449
    %v465 = vpack.c.b16 %v452, %v451
    %v466 = vpack.c.b16 %v454, %v453
    %v467 = vpack.c.b16 %v456, %v455
    %v468 = vpack.c.b16 %v458, %v457
    %v469 = vpack.c.b16 %v460, %v459
    %v470 = vpack.c.b16 %v462, %v461
    %479 = vmatprep.subr.bf16.mxu0 0
    %480 = vmatpush1.bf16.msra.mxu0 %v463
    %481 = vmatprep.subr.bf16.mxu0 0
    %482 = vmatpush1.bf16.msra.mxu0 %v464
    %483 = vmatprep.subr.bf16.mxu0 0
    %484 = vmatpush1.bf16.msra.mxu0 %v465
    %485 = vmatprep.subr.bf16.mxu0 0
    %486 = vmatpush1.bf16.msra.mxu0 %v466
    %487 = vmatprep.subr.bf16.mxu0 0
    %488 = vmatpush1.bf16.msra.mxu0 %v467
    %489 = vmatprep.subr.bf16.mxu0 0
    %490 = vmatpush1.bf16.msra.mxu0 %v468
    %491 = vmatprep.subr.bf16.mxu0 0
    %492 = vmatpush1.bf16.msra.mxu0 %v469
    %493 = vmatprep.subr.bf16.mxu0 0
    %494 = vmatpush1.bf16.msra.mxu0 %v470
    %495 = vmatprep.subr.bf16.mxu0 0
    %496 = vmatpush1.bf16.msra.mxu0 0
    %497 = vmatprep.subr.bf16.mxu0 0
    %498 = vmatpush1.bf16.msra.mxu0 0
    %499 = vmatprep.subr.bf16.mxu0 0
    %500 = vmatpush1.bf16.msra.mxu0 0
    %501 = vmatprep.subr.bf16.mxu0 0
    %502 = vmatpush1.bf16.msra.mxu0 0
    %503 = vmatprep.subr.bf16.mxu0 0
    %504 = vmatpush1.bf16.msra.mxu0 0
    %505 = vmatprep.subr.bf16.mxu0 0
    %506 = vmatpush1.bf16.msra.mxu0 0
    %507 = vmatprep.subr.bf16.mxu0 0
    %508 = vmatpush1.bf16.msra.mxu0 0
    %509 = vmatprep.subr.bf16.mxu0 0
    %510 = vmatpush1.bf16.msra.mxu0 0
    %511 = vmatprep.mubr.bf16.mxu0 0
    %512 = vmatmul.mubr.bf16.gmra.mrb[0].mxu0 %v407
    %v513 = vpop.f32.mrb[0].mxu0
    %v514 = vadd.f32 %v429, %v513
    %v515 = vpop.f32.mrb[0].mxu0
    %v516 = vpop.f32.mrb[0].mxu0
    %v517 = vpop.f32.mrb[0].mxu0
    %518 = vdwg.mxu0
    %vm519 = vcmask 130048
    %520 = vst.msk [vmem:[#allocation8] sm:$0xff] %vm519, %v514
    // Predicated region
    $region34: #{tpu_custom_call.1} parent=1 // pred_check
      _
    $region35: #{tpu_custom_call.1} parent=1 // pred_check_branch
      %522 = sbr.rel (0) target = $region37
    $region36: #{tpu_custom_call.1} parent=1 // pred_region
      %s524 = ssub.s32 128, 128
      %525 = vsyncadd [#allocation4], %s524
      %s527 = sshll.u32 [#allocation8], 4
      %s528 = int_to_ptr.vmem [resolvable:$true] %s527
      %530 = dma.vmem_to_hbm [thread:$0]  %s528, 128, %s5, [#allocation4]
    $region37: #{tpu_custom_call.1} parent=1 // pred_fallthru
      _
    // Predicated region
    $region38: #{tpu_custom_call.1} parent=1 // pred_check
      _
    $region39: #{tpu_custom_call.1} parent=1 // pred_check_branch
      %532 = sbr.rel (0) target = $region41
    $region40: #{tpu_custom_call.1} parent=1 // pred_region
      %533 = dma.done [#allocation4], 128
    $region41: #{tpu_custom_call.1} parent=1 // pred_fallthru
      _
    %534 = vsyncpa [#allocation3], 1
    %535 = vsyncpa [#allocation6], 1
    %536 = vsyncpa [#allocation4], 1

</llo_original>
